<compile_context>
chip_gen: v7x
topology: tpu7x:2x2x1
jax: 0.10.0
libtpu: 0.0.40
codegen_flags: <defaults>
</compile_context>

<pallas_src>
import jax
import jax.numpy as jnp
from jax.experimental import pallas as pl
from jax.experimental.pallas import tpu as pltpu


def _round_up(x, m):
    return ((x + m - 1) // m) * m


def mlp_policy_kernel(obs_ref, gid_ref, gtab_ref, w1_ref, w2_ref, b2_ref,
                      w3_ref, b3_ref, out_ref):
    """One batch tile of the policy MLP.

    obs_ref  : [TB, obs_dim]  f32   (cast to bf16 in-kernel)
    gid_ref  : [TB, 1]        int32 (goal index per row)
    gtab_ref : [4, H]         f32   (emb @ W1_goal + b1, pre-folded; VMEM-resident)
    w1_ref   : [obs_dim, H]   bf16  (obs slice of layer-1 weight; VMEM-resident)
    w2_ref   : [H, H]         bf16  (VMEM-resident)
    b2_ref   : [1, H]         f32
    w3_ref   : [H, A]         bf16  (VMEM-resident, unpadded head)
    b3_ref   : [1, A]         f32
    out_ref  : [TB, A]        f32
    """
    # In-kernel goal-bias "gather": 4-way select from the resident [4, H] table.
    gid = gid_ref[...]                              # (TB, 1) int32
    t = gtab_ref[...]                               # (4, H)  f32
    gbias = jnp.where(gid == 0, t[0:1, :],
            jnp.where(gid == 1, t[1:2, :],
            jnp.where(gid == 2, t[2:3, :], t[3:4, :])))      # (TB, H) f32

    # Layer 1: bf16 matmul, f32 accumulate; embedding + b1 arrive as gbias.
    obs = obs_ref[...].astype(jnp.bfloat16)
    h1 = jnp.dot(obs, w1_ref[...], preferred_element_type=jnp.float32)
    h1 = jnp.maximum(h1 + gbias, 0.0).astype(jnp.bfloat16)

    # Layer 2: (TB,H)x(H,H) bf16 MXU pass.
    h2 = jnp.dot(h1, w2_ref[...], preferred_element_type=jnp.float32)
    h2 = jnp.maximum(h2 + b2_ref[...], 0.0).astype(jnp.bfloat16)

    # Layer 3 (no activation); narrow output block (TB, A) — few HBM bytes.
    out = jnp.dot(h2, w3_ref[...], preferred_element_type=jnp.float32) + b3_ref[...]
    out_ref[...] = out.astype(out_ref.dtype)


def prepare_inference_params(params, obs_dim):
    """Fold embedding + b1 into a per-goal layer-1 bias table; cast weights to bf16."""
    emb, w1, b1, w2, b2, w3, b3 = params
    hidden = w1.shape[1]
    action_dim = w3.shape[1]

    w1_obs = w1[:obs_dim].astype(jnp.bfloat16)                        # [obs_dim, H]
    goal_bias_table = (emb @ w1[obs_dim:] + b1).astype(jnp.float32)   # [4, H]

    w2_bf = w2.astype(jnp.bfloat16)
    b2_f = b2.reshape(1, hidden).astype(jnp.float32)
    w3_bf = w3.astype(jnp.bfloat16)                                   # [H, A] (unpadded)
    b3_f = b3.reshape(1, action_dim).astype(jnp.float32)
    return (w1_obs, goal_bias_table, w2_bf, b2_f, w3_bf, b3_f)


def _xla_forward(obs, goal_idx, inf_params):
    """Small-batch fallback: same folded-parameter math as the kernel, plain XLA."""
    w1_obs, gtab, w2, b2, w3, b3 = inf_params
    gbias = gtab[goal_idx]
    h1 = jnp.maximum(
        jnp.dot(obs.astype(jnp.bfloat16), w1_obs,
                preferred_element_type=jnp.float32) + gbias, 0.0)
    h2 = jnp.maximum(
        jnp.dot(h1.astype(jnp.bfloat16), w2,
                preferred_element_type=jnp.float32) + b2, 0.0)
    return jnp.dot(h2.astype(jnp.bfloat16), w3,
                   preferred_element_type=jnp.float32) + b3


def mlp_policy_forward(obs, goal_idx, inf_params, action_dim, *,
                       tile_b=512, use_pallas=None):
    """obs: [B, obs_dim] f32, goal_idx: [B] int  ->  [B, action_dim] f32."""
    w1_obs, gtab, w2, b2, w3, b3 = inf_params
    B, obs_dim = obs.shape
    hidden = w2.shape[0]
    a_dim = w3.shape[1]

    if use_pallas is None:
        use_pallas = B >= 256          # tiny batches: fused XLA beats any kernel
    if not use_pallas:
        return _xla_forward(obs, goal_idx, inf_params)[:, :action_dim]

    # Batch tile: multiple of 8 sublanes, capped at tile_b; for large B pick tb
    # so the grid has >= 2 steps (even split across v7x's two TensorCores).
    tb = min(tile_b, max(8, _round_up(pl.cdiv(B, 2), 8)))
    b_pad = _round_up(B, tb)
    grid = (b_pad // tb,)

    gid = goal_idx.astype(jnp.int32).reshape(B, 1)
    if b_pad != B:
        obs = jnp.pad(obs, ((0, b_pad - B), (0, 0)))
        gid = jnp.pad(gid, ((0, b_pad - B), (0, 0)))

    out = pl.pallas_call(
        mlp_policy_kernel,
        out_shape=jax.ShapeDtypeStruct((b_pad, a_dim), jnp.float32),
        grid=grid,
        in_specs=[
            pl.BlockSpec((tb, obs_dim), lambda i: (i, 0)),      # obs   (batch-tiled)
            pl.BlockSpec((tb, 1), lambda i: (i, 0)),            # goal_idx (batch-tiled)
            pl.BlockSpec((4, hidden), lambda i: (0, 0)),        # goal bias table (resident)
            pl.BlockSpec((obs_dim, hidden), lambda i: (0, 0)),  # w1_obs (resident)
            pl.BlockSpec((hidden, hidden), lambda i: (0, 0)),   # w2     (resident)
            pl.BlockSpec((1, hidden), lambda i: (0, 0)),        # b2
            pl.BlockSpec((hidden, a_dim), lambda i: (0, 0)),    # w3     (resident)
            pl.BlockSpec((1, a_dim), lambda i: (0, 0)),         # b3
        ],
        out_specs=pl.BlockSpec((tb, a_dim), lambda i: (i, 0)),  # narrow (few HBM bytes)
        compiler_params=pltpu.CompilerParams(
            dimension_semantics=("parallel",)),                 # megacore batch split
    )(obs, gid, gtab, w1_obs, w2, b2, w3, b3)

    return out[:B, :action_dim]


def init_params(key, obs_dim, action_dim, goal_embedding_dim=16, hidden=256):
    ks = jax.random.split(key, 7)
    in_dim = obs_dim + goal_embedding_dim
    emb = jax.random.normal(ks[0], (4, goal_embedding_dim), jnp.float32)
    # Linear weights stored as [in, out] (equivalent to PyTorch x @ W.T + b).
    w1 = jax.random.normal(ks[1], (in_dim, hidden), jnp.float32) * 0.05
    b1 = jax.random.normal(ks[2], (1, hidden), jnp.float32) * 0.05
    w2 = jax.random.normal(ks[3], (hidden, hidden), jnp.float32) * 0.05
    b2 = jax.random.normal(ks[4], (1, hidden), jnp.float32) * 0.05
    w3 = jax.random.normal(ks[5], (hidden, action_dim), jnp.float32) * 0.05
    b3 = jax.random.normal(ks[6], (1, action_dim), jnp.float32) * 0.05
    return (emb, w1, b1, w2, b2, w3, b3)


def reference_forward(obs, goal_idx, params):
    emb, w1, b1, w2, b2, w3, b3 = params
    goal_emb = emb[goal_idx]                         # [B, goal_dim]
    inp = jnp.concatenate([obs, goal_emb], axis=-1)
    h1 = jnp.maximum(inp @ w1 + b1, 0.0)
    h2 = jnp.maximum(h1 @ w2 + b2, 0.0)
    return h2 @ w3 + b3


if __name__ == "__main__":
    B = 8
    obs_dim = 32
    action_dim = 8
    goal_embedding_dim = 16

    key = jax.random.PRNGKey(0)
    k_obs, k_goal, k_params = jax.random.split(key, 3)

    obs = jax.random.normal(k_obs, (B, obs_dim), jnp.float32)
    goal_idx = jax.random.randint(k_goal, (B,), 0, 4, jnp.int32)
    params = init_params(k_params, obs_dim, action_dim, goal_embedding_dim)
    inf_params = prepare_inference_params(params, obs_dim)

    # Force the Pallas path so the kernel is exercised even at this demo-sized B.
    out = mlp_policy_forward(obs, goal_idx, inf_params, action_dim, use_pallas=True)
    out = jax.block_until_ready(out)

    ref = reference_forward(obs, goal_idx, params)
    assert out.shape == (B, action_dim)
    # bf16 matmul inputs (f32 accumulation) -> looser tolerance than pure f32.
    assert jnp.allclose(out, ref, atol=2e-2, rtol=2e-2), "mismatch vs reference"

    print("KERNEL_OK")
</pallas_src>

<mosaic_0001>
module attributes {stable_mosaic.version = 11 : i64} {
  func.func @mlp_policy_kernel(%arg0: i32, %arg1: memref<8x32xf32, #tpu.memory_space<vmem>>, %arg2: memref<8x1xi32, #tpu.memory_space<vmem>>, %arg3: memref<4x256xf32, #tpu.memory_space<vmem>>, %arg4: memref<32x256xbf16, #tpu.memory_space<vmem>>, %arg5: memref<256x256xbf16, #tpu.memory_space<vmem>>, %arg6: memref<1x256xf32, #tpu.memory_space<vmem>>, %arg7: memref<256x8xbf16, #tpu.memory_space<vmem>>, %arg8: memref<1x8xf32, #tpu.memory_space<vmem>>, %arg9: memref<8x8xf32, #tpu.memory_space<vmem>>) attributes {dimension_semantics = [#tpu.dimension_semantics<parallel>], iteration_bounds = array<i64: 1>, scalar_prefetch = 0 : i64, scratch_operands = 0 : i64, tpu.core_type = #tpu.core_type<tc>, window_params = [{transform_indices = @transform_0, window_bounds = array<i64: 8, 32>}, {transform_indices = @transform_1, window_bounds = array<i64: 8, 1>}, {pipeline_mode = #tpu.pipeline_mode<synchronous>, transform_indices = @transform_2, window_bounds = array<i64: 4, 256>}, {pipeline_mode = #tpu.pipeline_mode<synchronous>, transform_indices = @transform_3, window_bounds = array<i64: 32, 256>}, {pipeline_mode = #tpu.pipeline_mode<synchronous>, transform_indices = @transform_4, window_bounds = array<i64: 256, 256>}, {pipeline_mode = #tpu.pipeline_mode<synchronous>, transform_indices = @transform_5, window_bounds = array<i64: 1, 256>}, {pipeline_mode = #tpu.pipeline_mode<synchronous>, transform_indices = @transform_6, window_bounds = array<i64: 256, 8>}, {pipeline_mode = #tpu.pipeline_mode<synchronous>, transform_indices = @transform_7, window_bounds = array<i64: 1, 8>}, {transform_indices = @transform_8, window_bounds = array<i64: 8, 8>}]} {
    %c0 = arith.constant 0 : index
    %c0_0 = arith.constant 0 : index
    %0 = vector.load %arg2[%c0, %c0_0] : memref<8x1xi32, #tpu.memory_space<vmem>>, vector<8x1xi32>
    %c0_1 = arith.constant 0 : index
    %c0_2 = arith.constant 0 : index
    %1 = vector.load %arg3[%c0_1, %c0_2] : memref<4x256xf32, #tpu.memory_space<vmem>>, vector<4x256xf32>
    %c0_i32 = arith.constant 0 : i32
    %2 = vector.broadcast %c0_i32 : i32 to vector<8x1xi32>
    %3 = arith.cmpi eq, %0, %2 : vector<8x1xi32>
    %4 = vector.extract_strided_slice %1 {offsets = [0, 0], sizes = [1, 256], strides = [1, 1]} : vector<4x256xf32> to vector<1x256xf32>
    %c1_i32 = arith.constant 1 : i32
    %5 = vector.broadcast %c1_i32 : i32 to vector<8x1xi32>
    %6 = arith.cmpi eq, %0, %5 : vector<8x1xi32>
    %7 = vector.extract_strided_slice %1 {offsets = [1, 0], sizes = [1, 256], strides = [1, 1]} : vector<4x256xf32> to vector<1x256xf32>
    %c2_i32 = arith.constant 2 : i32
    %8 = vector.broadcast %c2_i32 : i32 to vector<8x1xi32>
    %9 = arith.cmpi eq, %0, %8 : vector<8x1xi32>
    %10 = vector.extract_strided_slice %1 {offsets = [2, 0], sizes = [1, 256], strides = [1, 1]} : vector<4x256xf32> to vector<1x256xf32>
    %11 = vector.extract_strided_slice %1 {offsets = [3, 0], sizes = [1, 256], strides = [1, 1]} : vector<4x256xf32> to vector<1x256xf32>
    %12 = vector.shape_cast %9 : vector<8x1xi1> to vector<8x1xi1>
    %13 = vector.broadcast %12 : vector<8x1xi1> to vector<8x256xi1>
    %14 = vector.shape_cast %10 : vector<1x256xf32> to vector<1x256xf32>
    %15 = vector.broadcast %14 : vector<1x256xf32> to vector<8x256xf32>
    %16 = vector.shape_cast %11 : vector<1x256xf32> to vector<1x256xf32>
    %17 = vector.broadcast %16 : vector<1x256xf32> to vector<8x256xf32>
    %18 = arith.select %13, %15, %17 : vector<8x256xi1>, vector<8x256xf32>
    %19 = vector.shape_cast %6 : vector<8x1xi1> to vector<8x1xi1>
    %20 = vector.broadcast %19 : vector<8x1xi1> to vector<8x256xi1>
    %21 = vector.shape_cast %7 : vector<1x256xf32> to vector<1x256xf32>
    %22 = vector.broadcast %21 : vector<1x256xf32> to vector<8x256xf32>
    %23 = arith.select %20, %22, %18 : vector<8x256xi1>, vector<8x256xf32>
    %24 = vector.shape_cast %3 : vector<8x1xi1> to vector<8x1xi1>
    %25 = vector.broadcast %24 : vector<8x1xi1> to vector<8x256xi1>
    %26 = vector.shape_cast %4 : vector<1x256xf32> to vector<1x256xf32>
    %27 = vector.broadcast %26 : vector<1x256xf32> to vector<8x256xf32>
    %28 = arith.select %25, %27, %23 : vector<8x256xi1>, vector<8x256xf32>
    %c0_3 = arith.constant 0 : index
    %c0_4 = arith.constant 0 : index
    %29 = vector.load %arg1[%c0_3, %c0_4] : memref<8x32xf32, #tpu.memory_space<vmem>>, vector<8x32xf32>
    %30 = arith.truncf %29 : vector<8x32xf32> to vector<8x32xbf16>
    %c0_5 = arith.constant 0 : index
    %c0_6 = arith.constant 0 : index
    %31 = vector.load %arg4[%c0_5, %c0_6] : memref<32x256xbf16, #tpu.memory_space<vmem>>, vector<32x256xbf16>
    %cst = arith.constant dense<0.000000e+00> : vector<8x256xf32>
    %32 = tpu.matmul %30, %31, %cst {dimension_numbers = #tpu.dot_dimension_numbers<[1], [0], [0], [1], [0, 0, 1, 1], [], []>} : vector<8x32xbf16>, vector<32x256xbf16>, vector<8x256xf32> -> vector<8x256xf32>
    %33 = arith.addf %32, %28 : vector<8x256xf32>
    %cst_7 = arith.constant 0.000000e+00 : f32
    %34 = vector.broadcast %cst_7 : f32 to vector<8x256xf32>
    %35 = arith.maximumf %33, %34 : vector<8x256xf32>
    %36 = arith.truncf %35 : vector<8x256xf32> to vector<8x256xbf16>
    %c0_8 = arith.constant 0 : index
    %c0_9 = arith.constant 0 : index
    %37 = vector.load %arg5[%c0_8, %c0_9] : memref<256x256xbf16, #tpu.memory_space<vmem>>, vector<256x256xbf16>
    %cst_10 = arith.constant dense<0.000000e+00> : vector<8x256xf32>
    %38 = tpu.matmul %36, %37, %cst_10 {dimension_numbers = #tpu.dot_dimension_numbers<[1], [0], [0], [1], [0, 0, 1, 1], [], []>} : vector<8x256xbf16>, vector<256x256xbf16>, vector<8x256xf32> -> vector<8x256xf32>
    %c0_11 = arith.constant 0 : index
    %c0_12 = arith.constant 0 : index
    %39 = vector.load %arg6[%c0_11, %c0_12] : memref<1x256xf32, #tpu.memory_space<vmem>>, vector<1x256xf32>
    %40 = vector.broadcast %39 : vector<1x256xf32> to vector<8x256xf32>
    %41 = arith.addf %38, %40 : vector<8x256xf32>
    %cst_13 = arith.constant 0.000000e+00 : f32
    %42 = vector.broadcast %cst_13 : f32 to vector<8x256xf32>
    %43 = arith.maximumf %41, %42 : vector<8x256xf32>
    %44 = arith.truncf %43 : vector<8x256xf32> to vector<8x256xbf16>
    %c0_14 = arith.constant 0 : index
    %c0_15 = arith.constant 0 : index
    %45 = vector.load %arg7[%c0_14, %c0_15] : memref<256x8xbf16, #tpu.memory_space<vmem>>, vector<256x8xbf16>
    %cst_16 = arith.constant dense<0.000000e+00> : vector<8x8xf32>
    %46 = tpu.matmul %44, %45, %cst_16 {dimension_numbers = #tpu.dot_dimension_numbers<[1], [0], [0], [1], [0, 0, 1, 1], [], []>} : vector<8x256xbf16>, vector<256x8xbf16>, vector<8x8xf32> -> vector<8x8xf32>
    %c0_17 = arith.constant 0 : index
    %c0_18 = arith.constant 0 : index
    %47 = vector.load %arg8[%c0_17, %c0_18] : memref<1x8xf32, #tpu.memory_space<vmem>>, vector<1x8xf32>
    %48 = vector.broadcast %47 : vector<1x8xf32> to vector<8x8xf32>
    %49 = arith.addf %46, %48 : vector<8x8xf32>
    %c0_19 = arith.constant 0 : index
    %c0_20 = arith.constant 0 : index
    %50 = vector.load %arg9[%c0_19, %c0_20] : memref<8x8xf32, #tpu.memory_space<vmem>>, vector<8x8xf32>
    tpu.vector_store %arg9[%c0_19, %c0_20], %49 {strides = array<i32>} : memref<8x8xf32, #tpu.memory_space<vmem>>, vector<8x8xf32>,
    return
  }
  func.func @transform_0(%arg0: i32) -> (i32, i32) {
    %c0_i32 = arith.constant 0 : i32
    %c0_i32_0 = arith.constant 0 : i32
    return %arg0, %c0_i32 : i32, i32
  }
  func.func @transform_1(%arg0: i32) -> (i32, i32) {
    %c0_i32 = arith.constant 0 : i32
    %c0_i32_0 = arith.constant 0 : i32
    return %arg0, %c0_i32 : i32, i32
  }
  func.func @transform_2(%arg0: i32) -> (i32, i32) {
    %c0_i32 = arith.constant 0 : i32
    %c0_i32_0 = arith.constant 0 : i32
    %c0_i32_1 = arith.constant 0 : i32
    return %c0_i32, %c0_i32_0 : i32, i32
  }
  func.func @transform_3(%arg0: i32) -> (i32, i32) {
    %c0_i32 = arith.constant 0 : i32
    %c0_i32_0 = arith.constant 0 : i32
    %c0_i32_1 = arith.constant 0 : i32
    return %c0_i32, %c0_i32_0 : i32, i32
  }
  func.func @transform_4(%arg0: i32) -> (i32, i32) {
    %c0_i32 = arith.constant 0 : i32
    %c0_i32_0 = arith.constant 0 : i32
    %c0_i32_1 = arith.constant 0 : i32
    return %c0_i32, %c0_i32_0 : i32, i32
  }
  func.func @transform_5(%arg0: i32) -> (i32, i32) {
    %c0_i32 = arith.constant 0 : i32
    %c0_i32_0 = arith.constant 0 : i32
    %c0_i32_1 = arith.constant 0 : i32
    return %c0_i32, %c0_i32_0 : i32, i32
  }
  func.func @transform_6(%arg0: i32) -> (i32, i32) {
    %c0_i32 = arith.constant 0 : i32
    %c0_i32_0 = arith.constant 0 : i32
    %c0_i32_1 = arith.constant 0 : i32
    return %c0_i32, %c0_i32_0 : i32, i32
  }
  func.func @transform_7(%arg0: i32) -> (i32, i32) {
    %c0_i32 = arith.constant 0 : i32
    %c0_i32_0 = arith.constant 0 : i32
    %c0_i32_1 = arith.constant 0 : i32
    return %c0_i32, %c0_i32_0 : i32, i32
  }
  func.func @transform_8(%arg0: i32) -> (i32, i32) {
    %c0_i32 = arith.constant 0 : i32
    %c0_i32_0 = arith.constant 0 : i32
    return %arg0, %c0_i32 : i32, i32
  }
}

</mosaic_0001>

<llo_original>
// kernel: tpu_custom_call.1
$region0: #{tpu_custom_call.1}
  #allocation0 [shape = 'u32[]', space=smem, size = 0x4, offset = 0x4, fixed_abs, tag = 'smem constant byte address 0x4 - core index']
  #allocation1 [shape = 'u32[144,128]{1,0:T(1,128)}', space=vmem, size = 0x12000, scoped, tag = 'internal scratch']
  %s0 = inlined_call_operand.vmem [shape: f32[8,32], index: 0, kind: input, shape index: {}]
  %s1 = inlined_call_operand.vmem [shape: s32[8,1], index: 1, kind: input, shape index: {}]
  %s2 = inlined_call_operand.vmem [shape: f32[4,256], index: 2, kind: input, shape index: {}]
  %s3 = inlined_call_operand.vmem [shape: bf16[32,256], index: 3, kind: input, shape index: {}]
  %s4 = inlined_call_operand.hbm [shape: bf16[256,256], index: 4, kind: input, shape index: {}]
  %s5 = inlined_call_operand.vmem [shape: f32[1,256], index: 5, kind: input, shape index: {}]
  %s6 = inlined_call_operand.vmem [shape: bf16[256,8], index: 6, kind: input, shape index: {}]
  %s7 = inlined_call_operand.vmem [shape: f32[1,8], index: 7, kind: input, shape index: {}]
  %s8 = inlined_call_operand.hbm [shape: f32[8,8], index: 8, kind: output, shape index: {}]
  %s9 = sld [smem:[#allocation0]]
  $region46: #{tpu_custom_call.1} parent=0
    _
  %s11 = ssub.s32 1, %s9
  %s12 = scalar_select 0, %s11, %s9
  $region1: #{tpu_custom_call.1} parent=0
    #allocation2 [shape = 'u8[131072]{0}', space=vmem, size = 0x20000, scoped, tag = 'input window, operand 4, single buffered']
    #allocation3 [shape = 's32[1]{0}', space=sflag, size = 0x4, scoped, tag = 'scoped memory for tpu_custom_call.1']
    #allocation4 [shape = 's32[1]{0}', space=sflag, size = 0x4, scoped, tag = 'scoped memory for tpu_custom_call.1']
    #allocation5 [shape = 'u8[4096]{0}', space=vmem, size = 0x1000, scoped, tag = 'output window, operand 0, single buffered']
    %13 = vsyncpa [#allocation3], 0
    %14 = vsyncpa [#allocation4], 0
    // Predicated region
    $region2: #{tpu_custom_call.1} parent=1 // pred_check
      _
    $region3: #{tpu_custom_call.1} parent=1 // pred_check_branch
      %16 = sbr.rel (0) target = $region5
    $region4: #{tpu_custom_call.1} parent=1 // pred_region
      _
    $region5: #{tpu_custom_call.1} parent=1 // pred_fallthru
      _
    // Predicated region
    $region6: #{tpu_custom_call.1} parent=1 // pred_check
      _
    $region7: #{tpu_custom_call.1} parent=1 // pred_check_branch
      %18 = sbr.rel (0) target = $region9
    $region8: #{tpu_custom_call.1} parent=1 // pred_region
      _
    $region9: #{tpu_custom_call.1} parent=1 // pred_fallthru
      _
    // Predicated region
    $region10: #{tpu_custom_call.1} parent=1 // pred_check
      _
    $region11: #{tpu_custom_call.1} parent=1 // pred_check_branch
      %20 = sbr.rel (0) target = $region13
    $region12: #{tpu_custom_call.1} parent=1 // pred_region
      _
    $region13: #{tpu_custom_call.1} parent=1 // pred_fallthru
      _
    // Predicated region
    $region14: #{tpu_custom_call.1} parent=1 // pred_check
      _
    $region15: #{tpu_custom_call.1} parent=1 // pred_check_branch
      %22 = sbr.rel (0) target = $region17
    $region16: #{tpu_custom_call.1} parent=1 // pred_region
      _
    $region17: #{tpu_custom_call.1} parent=1 // pred_fallthru
      _
    // Predicated region
    $region18: #{tpu_custom_call.1} parent=1 // pred_check
      _
    $region19: #{tpu_custom_call.1} parent=1 // pred_check_branch
      %24 = sbr.rel (0) target = $region21
    $region20: #{tpu_custom_call.1} parent=1 // pred_region
      %s26 = ssub.s32 4096, 4096
      %27 = vsyncadd [#allocation3], %s26
      %s28 = sshll.u32 [#allocation2], 4
      %s29 = int_to_ptr.vmem [resolvable:$true] %s28
      %34 = dma.hbm_to_vmem [thread:$0]  %s4, 4096, %s29, [#allocation3], 128, 128, 8
    $region21: #{tpu_custom_call.1} parent=1 // pred_fallthru
      _
    // Predicated region
    $region22: #{tpu_custom_call.1} parent=1 // pred_check
      _
    $region23: #{tpu_custom_call.1} parent=1 // pred_check_branch
      %36 = sbr.rel (0) target = $region25
    $region24: #{tpu_custom_call.1} parent=1 // pred_region
      _
    $region25: #{tpu_custom_call.1} parent=1 // pred_fallthru
      _
    // Predicated region
    $region26: #{tpu_custom_call.1} parent=1 // pred_check
      _
    $region27: #{tpu_custom_call.1} parent=1 // pred_check_branch
      %38 = sbr.rel (0) target = $region29
    $region28: #{tpu_custom_call.1} parent=1 // pred_region
      _
    $region29: #{tpu_custom_call.1} parent=1 // pred_fallthru
      _
    // Predicated region
    $region30: #{tpu_custom_call.1} parent=1 // pred_check
      _
    $region31: #{tpu_custom_call.1} parent=1 // pred_check_branch
      %40 = sbr.rel (0) target = $region33
    $region32: #{tpu_custom_call.1} parent=1 // pred_region
      _
    $region33: #{tpu_custom_call.1} parent=1 // pred_fallthru
      _
    // Predicated region
    $region34: #{tpu_custom_call.1} parent=1 // pred_check
      _
    $region35: #{tpu_custom_call.1} parent=1 // pred_check_branch
      %42 = sbr.rel (0) target = $region37
    $region36: #{tpu_custom_call.1} parent=1 // pred_region
      %43 = dma.done [#allocation3], 4096
    $region37: #{tpu_custom_call.1} parent=1 // pred_fallthru
      _
    %v45 = vld [vmem:[%s1] sm:$0xff]
    %v46 = vld [vmem:[%s2] sm:$0xff]
    %vm47 = vcmp.eq.s32.totalorder %v45, 0
    %vm48 = vcmp.eq.s32.totalorder %v45, 1
    %vm49 = vcmp.eq.s32.totalorder %v45, 2
    %v50 = vsel %vm49, 1, 0
    %51 = vset.pattern.permute.xlu0 0
    %52 = vperm.xlu0 %51, %v50
    %v53 = vpop.permute.xlu0 %52
    %vm54 = vcmp.eq.s32.totalorder %v53, 1
    %v56 = vlaneseq
    %v57 = vshrl.u32 %v56, 7
    %v58 = vsub.s32 2, %v57
    %v59 = vrot.slane %v46, %v58
    %v60 = vlaneseq
    %v61 = vshrl.u32 %v60, 7
    %v62 = vsub.s32 6, %v61
    %v63 = vrot.slane %v46, %v62
    %v66 = vlaneseq
    %v67 = vshrl.u32 %v66, 7
    %v68 = vsub.s32 2, %v67
    %v69 = vrot.slane %v59, %v68
    %v70 = vlaneseq
    %v71 = vshrl.u32 %v70, 7
    %v72 = vsub.s32 2, %v71
    %v73 = vrot.slane %v63, %v72
    %v74 = vlaneseq
    %v75 = vshrl.u32 %v74, 7
    %v76 = vsub.s32 3, %v75
    %v77 = vrot.slane %v46, %v76
    %v78 = vlaneseq
    %v79 = vshrl.u32 %v78, 7
    %v80 = vsub.s32 7, %v79
    %v81 = vrot.slane %v46, %v80
    %v84 = vlaneseq
    %v85 = vshrl.u32 %v84, 7
    %v86 = vsub.s32 3, %v85
    %v87 = vrot.slane %v77, %v86
    %v88 = vlaneseq
    %v89 = vshrl.u32 %v88, 7
    %v90 = vsub.s32 3, %v89
    %v91 = vrot.slane %v81, %v90
    %v92 = vsel %vm54, %v69, %v87
    %v93 = vsel %vm54, %v73, %v91
    %v94 = vsel %vm48, 1, 0
    %95 = vset.pattern.permute.xlu0 0
    %96 = vperm.xlu0 %95, %v94
    %v97 = vpop.permute.xlu0 %96
    %vm98 = vcmp.eq.s32.totalorder %v97, 1
    %v99 = vlaneseq
    %v100 = vshrl.u32 %v99, 7
    %v101 = vsub.s32 1, %v100
    %v102 = vrot.slane %v46, %v101
    %v103 = vlaneseq
    %v104 = vshrl.u32 %v103, 7
    %v105 = vsub.s32 5, %v104
    %v106 = vrot.slane %v46, %v105
    %v109 = vlaneseq
    %v110 = vshrl.u32 %v109, 7
    %v111 = vsub.s32 1, %v110
    %v112 = vrot.slane %v102, %v111
    %v113 = vlaneseq
    %v114 = vshrl.u32 %v113, 7
    %v115 = vsub.s32 1, %v114
    %v116 = vrot.slane %v106, %v115
    %v117 = vsel %vm98, %v112, %v92
    %v118 = vsel %vm98, %v116, %v93
    %v119 = vsel %vm47, 1, 0
    %120 = vset.pattern.permute.xlu0 0
    %121 = vperm.xlu0 %120, %v119
    %v122 = vpop.permute.xlu0 %121
    %vm123 = vcmp.eq.s32.totalorder %v122, 1
    %v124 = vlaneseq
    %v125 = vshrl.u32 %v124, 7
    %v126 = vsub.s32 0, %v125
    %v127 = vrot.slane %v46, %v126
    %v128 = vlaneseq
    %v129 = vshrl.u32 %v128, 7
    %v130 = vsub.s32 4, %v129
    %v131 = vrot.slane %v46, %v130
    %v134 = vlaneseq
    %v135 = vshrl.u32 %v134, 7
    %v136 = vsub.s32 0, %v135
    %v137 = vrot.slane %v127, %v136
    %v138 = vlaneseq
    %v139 = vshrl.u32 %v138, 7
    %v140 = vsub.s32 0, %v139
    %v141 = vrot.slane %v131, %v140
    %v142 = vsel %vm123, %v137, %v117
    %v143 = vsel %vm123, %v141, %v118
    %v144 = vld [vmem:[%s0] sm:$0xff]
    %v145 = vpack.c.bf16 %v144, %v144
    %v146 = vld [vmem:[%s3] sm:$0xff]
    %v147 = vld [vmem:[%s3 + $0x8] sm:$0xff]
    %v148 = vld [vmem:[%s3 + $0x10] sm:$0xff]
    %v149 = vld [vmem:[%s3 + $0x18] sm:$0xff]
    %v154 = vunpack.c.l.b16 %v146
    %v155 = vunpack.c.h.b16 %v146
    %v156 = vunpack.c.l.b16 %v147
    %v157 = vunpack.c.h.b16 %v147
    %v158 = vunpack.c.l.b16 %v148
    %v159 = vunpack.c.h.b16 %v148
    %v160 = vunpack.c.l.b16 %v149
    %v161 = vunpack.c.h.b16 %v149
    %v162 = vpack.c.b16 %v156, %v154
    %v163 = vpack.c.b16 %v157, %v155
    %v164 = vpack.c.b16 %v160, %v158
    %v165 = vpack.c.b16 %v161, %v159
    %vm170 = vcmask 261120
    %v172 = vsel %vm170, %v145, 0
    %174 = vmatprep.subr.bf16.mxu0 %v163
    %175 = vmatpush1.bf16.msra.mxu0 %v162
    %176 = vmatprep.subr.bf16.mxu0 %v165
    %177 = vmatpush1.bf16.msra.mxu0 %v164
    %178 = vmatprep.subr.bf16.mxu0 0
    %179 = vmatpush1.bf16.msra.mxu0 0
    %180 = vmatprep.subr.bf16.mxu0 0
    %181 = vmatpush1.bf16.msra.mxu0 0
    %182 = vmatprep.subr.bf16.mxu0 0
    %183 = vmatpush1.bf16.msra.mxu0 0
    %184 = vmatprep.subr.bf16.mxu0 0
    %185 = vmatpush1.bf16.msra.mxu0 0
    %186 = vmatprep.subr.bf16.mxu0 0
    %187 = vmatpush1.bf16.msra.mxu0 0
    %188 = vmatprep.subr.bf16.mxu0 0
    %189 = vmatpush1.bf16.msra.mxu0 0
    %190 = vmatprep.subr.bf16.mxu0 0
    %191 = vmatpush1.bf16.msra.mxu0 0
    %192 = vmatprep.subr.bf16.mxu0 0
    %193 = vmatpush1.bf16.msra.mxu0 0
    %194 = vmatprep.subr.bf16.mxu0 0
    %195 = vmatpush1.bf16.msra.mxu0 0
    %196 = vmatprep.subr.bf16.mxu0 0
    %197 = vmatpush1.bf16.msra.mxu0 0
    %198 = vmatprep.subr.bf16.mxu0 0
    %199 = vmatpush1.bf16.msra.mxu0 0
    %200 = vmatprep.subr.bf16.mxu0 0
    %201 = vmatpush1.bf16.msra.mxu0 0
    %202 = vmatprep.subr.bf16.mxu0 0
    %203 = vmatpush1.bf16.msra.mxu0 0
    %204 = vmatprep.subr.bf16.mxu0 0
    %205 = vmatpush1.bf16.msra.mxu0 0
    %206 = vmatprep.mubr.bf16.mxu0 0
    %207 = vmatmul.mubr.bf16.gmra.mrb[0].mxu0 %v172
    %v208 = vpop.f32.mrb[0].mxu0
    %v209 = vadd.f32 %v142, %v208
    %v210 = vpop.f32.mrb[0].mxu0
    %v211 = vadd.f32 %v143, %v210
    %v212 = vpop.f32.mrb[0].mxu0
    %v213 = vpop.f32.mrb[0].mxu0
    %214 = vdwg.mxu0
    %v215 = vmax.f32 %v209, 0.0
    %v216 = vmax.f32 %v211, 0.0
    %v217 = vpack.c.bf16 %v215, %v215
    %v218 = vpack.c.bf16 %v216, %v216
    %v219 = vld [vmem:[#allocation2] sm:$0xff]
    %v220 = vld [vmem:[#allocation2 + $0x8] sm:$0xff]
    %v221 = vld [vmem:[#allocation2 + $0x10] sm:$0xff]
    %v222 = vld [vmem:[#allocation2 + $0x18] sm:$0xff]
    %v223 = vld [vmem:[#allocation2 + $0x20] sm:$0xff]
    %v224 = vld [vmem:[#allocation2 + $0x28] sm:$0xff]
    %v225 = vld [vmem:[#allocation2 + $0x30] sm:$0xff]
    %v226 = vld [vmem:[#allocation2 + $0x38] sm:$0xff]
    %v227 = vld [vmem:[#allocation2 + $0x40] sm:$0xff]
    %v228 = vld [vmem:[#allocation2 + $0x48] sm:$0xff]
    %v229 = vld [vmem:[#allocation2 + $0x50] sm:$0xff]
    %v230 = vld [vmem:[#allocation2 + $0x58] sm:$0xff]
    %v231 = vld [vmem:[#allocation2 + $0x60] sm:$0xff]
    %v232 = vld [vmem:[#allocation2 + $0x68] sm:$0xff]
    %v233 = vld [vmem:[#allocation2 + $0x70] sm:$0xff]
    %v234 = vld [vmem:[#allocation2 + $0x78] sm:$0xff]
    %v235 = vld [vmem:[#allocation2 + $0x80] sm:$0xff]
    %v236 = vld [vmem:[#allocation2 + $0x88] sm:$0xff]
    %v237 = vld [vmem:[#allocation2 + $0x90] sm:$0xff]
    %v238 = vld [vmem:[#allocation2 + $0x98] sm:$0xff]
    %v239 = vld [vmem:[#allocation2 + $0xa0] sm:$0xff]
    %v240 = vld [vmem:[#allocation2 + $0xa8] sm:$0xff]
    %v241 = vld [vmem:[#allocation2 + $0xb0] sm:$0xff]
    %v242 = vld [vmem:[#allocation2 + $0xb8] sm:$0xff]
    %v243 = vld [vmem:[#allocation2 + $0xc0] sm:$0xff]
    %v244 = vld [vmem:[#allocation2 + $0xc8] sm:$0xff]
    %v245 = vld [vmem:[#allocation2 + $0xd0] sm:$0xff]
    %v246 = vld [vmem:[#allocation2 + $0xd8] sm:$0xff]
    %v247 = vld [vmem:[#allocation2 + $0xe0] sm:$0xff]
    %v248 = vld [vmem:[#allocation2 + $0xe8] sm:$0xff]
    %v249 = vld [vmem:[#allocation2 + $0xf0] sm:$0xff]
    %v250 = vld [vmem:[#allocation2 + $0xf8] sm:$0xff]
    %v251 = vld [vmem:[%s5] sm:$0x3]
    %v253 = vlaneseq
    %v254 = vshrl.u32 %v253, 7
    %v255 = vsub.s32 0, %v254
    %v256 = vrot.slane %v251, %v255
    %v257 = vlaneseq
    %v258 = vshrl.u32 %v257, 7
    %v259 = vsub.s32 1, %v258
    %v260 = vrot.slane %v251, %v259
    %v295 = vunpack.c.l.b16 %v219
    %v296 = vunpack.c.h.b16 %v219
    %v297 = vunpack.c.l.b16 %v220
    %v298 = vunpack.c.h.b16 %v220
    %v299 = vunpack.c.l.b16 %v221
    %v300 = vunpack.c.h.b16 %v221
    %v301 = vunpack.c.l.b16 %v222
    %v302 = vunpack.c.h.b16 %v222
    %v303 = vunpack.c.l.b16 %v223
    %v304 = vunpack.c.h.b16 %v223
    %v305 = vunpack.c.l.b16 %v224
    %v306 = vunpack.c.h.b16 %v224
    %v307 = vunpack.c.l.b16 %v225
    %v308 = vunpack.c.h.b16 %v225
    %v309 = vunpack.c.l.b16 %v226
    %v310 = vunpack.c.h.b16 %v226
    %v311 = vunpack.c.l.b16 %v227
    %v312 = vunpack.c.h.b16 %v227
    %v313 = vunpack.c.l.b16 %v228
    %v314 = vunpack.c.h.b16 %v228
    %v315 = vunpack.c.l.b16 %v229
    %v316 = vunpack.c.h.b16 %v229
    %v317 = vunpack.c.l.b16 %v230
    %v318 = vunpack.c.h.b16 %v230
    %v319 = vunpack.c.l.b16 %v231
    %v320 = vunpack.c.h.b16 %v231
    %v321 = vunpack.c.l.b16 %v232
    %v322 = vunpack.c.h.b16 %v232
    %v323 = vunpack.c.l.b16 %v233
    %v324 = vunpack.c.h.b16 %v233
    %v325 = vunpack.c.l.b16 %v234
    %v326 = vunpack.c.h.b16 %v234
    %v327 = vunpack.c.l.b16 %v235
    %v328 = vunpack.c.h.b16 %v235
    %v329 = vunpack.c.l.b16 %v236
    %v330 = vunpack.c.h.b16 %v236
    %v331 = vunpack.c.l.b16 %v237
    %v332 = vunpack.c.h.b16 %v237
    %v333 = vunpack.c.l.b16 %v238
    %v334 = vunpack.c.h.b16 %v238
    %v335 = vunpack.c.l.b16 %v239
    %v336 = vunpack.c.h.b16 %v239
    %v337 = vunpack.c.l.b16 %v240
    %v338 = vunpack.c.h.b16 %v240
    %v339 = vunpack.c.l.b16 %v241
    %v340 = vunpack.c.h.b16 %v241
    %v341 = vunpack.c.l.b16 %v242
    %v342 = vunpack.c.h.b16 %v242
    %v343 = vunpack.c.l.b16 %v243
    %v344 = vunpack.c.h.b16 %v243
    %v345 = vunpack.c.l.b16 %v244
    %v346 = vunpack.c.h.b16 %v244
    %v347 = vunpack.c.l.b16 %v245
    %v348 = vunpack.c.h.b16 %v245
    %v349 = vunpack.c.l.b16 %v246
    %v350 = vunpack.c.h.b16 %v246
    %v351 = vunpack.c.l.b16 %v247
    %v352 = vunpack.c.h.b16 %v247
    %v353 = vunpack.c.l.b16 %v248
    %v354 = vunpack.c.h.b16 %v248
    %v355 = vunpack.c.l.b16 %v249
    %v356 = vunpack.c.h.b16 %v249
    %v357 = vunpack.c.l.b16 %v250
    %v358 = vunpack.c.h.b16 %v250
    %v359 = vpack.c.b16 %v297, %v295
    %v360 = vpack.c.b16 %v298, %v296
    %v361 = vpack.c.b16 %v301, %v299
    %v362 = vpack.c.b16 %v302, %v300
    %v363 = vpack.c.b16 %v305, %v303
    %v364 = vpack.c.b16 %v306, %v304
    %v365 = vpack.c.b16 %v309, %v307
    %v366 = vpack.c.b16 %v310, %v308
    %v367 = vpack.c.b16 %v313, %v311
    %v368 = vpack.c.b16 %v314, %v312
    %v369 = vpack.c.b16 %v317, %v315
    %v370 = vpack.c.b16 %v318, %v316
    %v371 = vpack.c.b16 %v321, %v319
    %v372 = vpack.c.b16 %v322, %v320
    %v373 = vpack.c.b16 %v325, %v323
    %v374 = vpack.c.b16 %v326, %v324
    %v375 = vpack.c.b16 %v329, %v327
    %v376 = vpack.c.b16 %v330, %v328
    %v377 = vpack.c.b16 %v333, %v331
    %v378 = vpack.c.b16 %v334, %v332
    %v379 = vpack.c.b16 %v337, %v335
    %v380 = vpack.c.b16 %v338, %v336
    %v381 = vpack.c.b16 %v341, %v339
    %v382 = vpack.c.b16 %v342, %v340
    %v383 = vpack.c.b16 %v345, %v343
    %v384 = vpack.c.b16 %v346, %v344
    %v385 = vpack.c.b16 %v349, %v347
    %v386 = vpack.c.b16 %v350, %v348
    %v387 = vpack.c.b16 %v353, %v351
    %v388 = vpack.c.b16 %v354, %v352
    %v389 = vpack.c.b16 %v357, %v355
    %v390 = vpack.c.b16 %v358, %v356
    %423 = vmatprep.subr.bf16.mxu0 %v360
    %424 = vmatpush1.bf16.msra.mxu0 %v359
    %425 = vmatprep.subr.bf16.mxu0 %v362
    %426 = vmatpush1.bf16.msra.mxu0 %v361
    %427 = vmatprep.subr.bf16.mxu0 %v364
    %428 = vmatpush1.bf16.msra.mxu0 %v363
    %429 = vmatprep.subr.bf16.mxu0 %v366
    %430 = vmatpush1.bf16.msra.mxu0 %v365
    %431 = vmatprep.subr.bf16.mxu0 %v368
    %432 = vmatpush1.bf16.msra.mxu0 %v367
    %433 = vmatprep.subr.bf16.mxu0 %v370
    %434 = vmatpush1.bf16.msra.mxu0 %v369
    %435 = vmatprep.subr.bf16.mxu0 %v372
    %436 = vmatpush1.bf16.msra.mxu0 %v371
    %437 = vmatprep.subr.bf16.mxu0 %v374
    %438 = vmatpush1.bf16.msra.mxu0 %v373
    %439 = vmatprep.subr.bf16.mxu0 %v376
    %440 = vmatpush1.bf16.msra.mxu0 %v375
    %441 = vmatprep.subr.bf16.mxu0 %v378
    %442 = vmatpush1.bf16.msra.mxu0 %v377
    %443 = vmatprep.subr.bf16.mxu0 %v380
    %444 = vmatpush1.bf16.msra.mxu0 %v379
    %445 = vmatprep.subr.bf16.mxu0 %v382
    %446 = vmatpush1.bf16.msra.mxu0 %v381
    %447 = vmatprep.subr.bf16.mxu0 %v384
    %448 = vmatpush1.bf16.msra.mxu0 %v383
    %449 = vmatprep.subr.bf16.mxu0 %v386
    %450 = vmatpush1.bf16.msra.mxu0 %v385
    %451 = vmatprep.subr.bf16.mxu0 %v388
    %452 = vmatpush1.bf16.msra.mxu0 %v387
    %453 = vmatprep.subr.bf16.mxu0 %v390
    %454 = vmatpush1.bf16.msra.mxu0 %v389
    %455 = vmatprep.mubr.bf16.mxu0 %v218
    %456 = vmatmul.mubr.bf16.gmra.mrb[0].mxu0 %v217
    %v457 = vpop.f32.mrb[0].mxu0
    %v458 = vadd.f32 %v256, %v457
    %v459 = vpop.f32.mrb[0].mxu0
    %v460 = vadd.f32 %v260, %v459
    %v461 = vpop.f32.mrb[0].mxu0
    %v462 = vpop.f32.mrb[0].mxu0
    %463 = vdwg.mxu0
    %v464 = vmax.f32 %v458, 0.0
    %v465 = vmax.f32 %v460, 0.0
    %v466 = vpack.c.bf16 %v464, %v464
    %v467 = vpack.c.bf16 %v465, %v465
    %v468 = vld [vmem:[%s6] sm:$0xf]
    %v469 = vld [vmem:[%s6 + $0x4] sm:$0xf]
    %v470 = vld [vmem:[%s6 + $0x8] sm:$0xf]
    %v471 = vld [vmem:[%s6 + $0xc] sm:$0xf]
    %v472 = vld [vmem:[%s6 + $0x10] sm:$0xf]
    %v473 = vld [vmem:[%s6 + $0x14] sm:$0xf]
    %v474 = vld [vmem:[%s6 + $0x18] sm:$0xf]
    %v475 = vld [vmem:[%s6 + $0x1c] sm:$0xf]
    %v476 = vld [vmem:[%s6 + $0x20] sm:$0xf]
    %v477 = vld [vmem:[%s6 + $0x24] sm:$0xf]
    %v478 = vld [vmem:[%s6 + $0x28] sm:$0xf]
    %v479 = vld [vmem:[%s6 + $0x2c] sm:$0xf]
    %v480 = vld [vmem:[%s6 + $0x30] sm:$0xf]
    %v481 = vld [vmem:[%s6 + $0x34] sm:$0xf]
    %v482 = vld [vmem:[%s6 + $0x38] sm:$0xf]
    %v483 = vld [vmem:[%s6 + $0x3c] sm:$0xf]
    %v484 = vld [vmem:[%s6 + $0x40] sm:$0xf]
    %v485 = vld [vmem:[%s6 + $0x44] sm:$0xf]
    %v486 = vld [vmem:[%s6 + $0x48] sm:$0xf]
    %v487 = vld [vmem:[%s6 + $0x4c] sm:$0xf]
    %v488 = vld [vmem:[%s6 + $0x50] sm:$0xf]
    %v489 = vld [vmem:[%s6 + $0x54] sm:$0xf]
    %v490 = vld [vmem:[%s6 + $0x58] sm:$0xf]
    %v491 = vld [vmem:[%s6 + $0x5c] sm:$0xf]
    %v492 = vld [vmem:[%s6 + $0x60] sm:$0xf]
    %v493 = vld [vmem:[%s6 + $0x64] sm:$0xf]
    %v494 = vld [vmem:[%s6 + $0x68] sm:$0xf]
    %v495 = vld [vmem:[%s6 + $0x6c] sm:$0xf]
    %v496 = vld [vmem:[%s6 + $0x70] sm:$0xf]
    %v497 = vld [vmem:[%s6 + $0x74] sm:$0xf]
    %v498 = vld [vmem:[%s6 + $0x78] sm:$0xf]
    %v499 = vld [vmem:[%s6 + $0x7c] sm:$0xf]
    %v500 = vld [vmem:[%s7] sm:$0x1]
    %v502 = vlaneseq
    %v503 = vshrl.u32 %v502, 7
    %v504 = vsub.s32 0, %v503
    %v505 = vrot.slane %v500, %v504
    %v539 = vunpack.c.l.b16 %v468
    %v540 = vunpack.c.l.b16 %v469
    %v541 = vunpack.c.l.b16 %v470
    %v542 = vunpack.c.l.b16 %v471
    %v543 = vunpack.c.l.b16 %v472
    %v544 = vunpack.c.l.b16 %v473
    %v545 = vunpack.c.l.b16 %v474
    %v546 = vunpack.c.l.b16 %v475
    %v547 = vunpack.c.l.b16 %v476
    %v548 = vunpack.c.l.b16 %v477
    %v549 = vunpack.c.l.b16 %v478
    %v550 = vunpack.c.l.b16 %v479
    %v551 = vunpack.c.l.b16 %v480
    %v552 = vunpack.c.l.b16 %v481
    %v553 = vunpack.c.l.b16 %v482
    %v554 = vunpack.c.l.b16 %v483
    %v555 = vunpack.c.l.b16 %v484
    %v556 = vunpack.c.l.b16 %v485
    %v557 = vunpack.c.l.b16 %v486
    %v558 = vunpack.c.l.b16 %v487
    %v559 = vunpack.c.l.b16 %v488
    %v560 = vunpack.c.l.b16 %v489
    %v561 = vunpack.c.l.b16 %v490
    %v562 = vunpack.c.l.b16 %v491
    %v563 = vunpack.c.l.b16 %v492
    %v564 = vunpack.c.l.b16 %v493
    %v565 = vunpack.c.l.b16 %v494
    %v566 = vunpack.c.l.b16 %v495
    %v567 = vunpack.c.l.b16 %v496
    %v568 = vunpack.c.l.b16 %v497
    %v569 = vunpack.c.l.b16 %v498
    %v570 = vunpack.c.l.b16 %v499
    %v571 = vpack.c.b16 %v540, %v539
    %v572 = vpack.c.b16 %v542, %v541
    %v573 = vpack.c.b16 %v544, %v543
    %v574 = vpack.c.b16 %v546, %v545
    %v575 = vpack.c.b16 %v548, %v547
    %v576 = vpack.c.b16 %v550, %v549
    %v577 = vpack.c.b16 %v552, %v551
    %v578 = vpack.c.b16 %v554, %v553
    %v579 = vpack.c.b16 %v556, %v555
    %v580 = vpack.c.b16 %v558, %v557
    %v581 = vpack.c.b16 %v560, %v559
    %v582 = vpack.c.b16 %v562, %v561
    %v583 = vpack.c.b16 %v564, %v563
    %v584 = vpack.c.b16 %v566, %v565
    %v585 = vpack.c.b16 %v568, %v567
    %v586 = vpack.c.b16 %v570, %v569
    %603 = vmatprep.subr.bf16.mxu0 0
    %604 = vmatpush1.bf16.msra.mxu0 %v571
    %605 = vmatprep.subr.bf16.mxu0 0
    %606 = vmatpush1.bf16.msra.mxu0 %v572
    %607 = vmatprep.subr.bf16.mxu0 0
    %608 = vmatpush1.bf16.msra.mxu0 %v573
    %609 = vmatprep.subr.bf16.mxu0 0
    %610 = vmatpush1.bf16.msra.mxu0 %v574
    %611 = vmatprep.subr.bf16.mxu0 0
    %612 = vmatpush1.bf16.msra.mxu0 %v575
    %613 = vmatprep.subr.bf16.mxu0 0
    %614 = vmatpush1.bf16.msra.mxu0 %v576
    %615 = vmatprep.subr.bf16.mxu0 0
    %616 = vmatpush1.bf16.msra.mxu0 %v577
    %617 = vmatprep.subr.bf16.mxu0 0
    %618 = vmatpush1.bf16.msra.mxu0 %v578
    %619 = vmatprep.subr.bf16.mxu0 0
    %620 = vmatpush1.bf16.msra.mxu0 %v579
    %621 = vmatprep.subr.bf16.mxu0 0
    %622 = vmatpush1.bf16.msra.mxu0 %v580
    %623 = vmatprep.subr.bf16.mxu0 0
    %624 = vmatpush1.bf16.msra.mxu0 %v581
    %625 = vmatprep.subr.bf16.mxu0 0
    %626 = vmatpush1.bf16.msra.mxu0 %v582
    %627 = vmatprep.subr.bf16.mxu0 0
    %628 = vmatpush1.bf16.msra.mxu0 %v583
    %629 = vmatprep.subr.bf16.mxu0 0
    %630 = vmatpush1.bf16.msra.mxu0 %v584
    %631 = vmatprep.subr.bf16.mxu0 0
    %632 = vmatpush1.bf16.msra.mxu0 %v585
    %633 = vmatprep.subr.bf16.mxu0 0
    %634 = vmatpush1.bf16.msra.mxu0 %v586
    %635 = vmatprep.mubr.bf16.mxu0 %v467
    %636 = vmatmul.mubr.bf16.gmra.mrb[0].mxu0 %v466
    %v637 = vpop.f32.mrb[0].mxu0
    %v638 = vadd.f32 %v505, %v637
    %v639 = vpop.f32.mrb[0].mxu0
    %v640 = vpop.f32.mrb[0].mxu0
    %v641 = vpop.f32.mrb[0].mxu0
    %642 = vdwg.mxu0
    %vm643 = vcmask 64512
    %644 = vst.msk [vmem:[#allocation5] sm:$0xff] %vm643, %v638
    // Predicated region
    $region38: #{tpu_custom_call.1} parent=1 // pred_check
      _
    $region39: #{tpu_custom_call.1} parent=1 // pred_check_branch
      %646 = sbr.rel (0) target = $region41
    $region40: #{tpu_custom_call.1} parent=1 // pred_region
      %s648 = ssub.s32 128, 128
      %649 = vsyncadd [#allocation4], %s648
      %s651 = sshll.u32 [#allocation5], 4
      %s652 = int_to_ptr.vmem [resolvable:$true] %s651
      %654 = dma.vmem_to_hbm [thread:$0]  %s652, 128, %s8, [#allocation4]
    $region41: #{tpu_custom_call.1} parent=1 // pred_fallthru
      _
    // Predicated region
    $region42: #{tpu_custom_call.1} parent=1 // pred_check
      _
    $region43: #{tpu_custom_call.1} parent=1 // pred_check_branch
      %656 = sbr.rel (0) target = $region45
    $region44: #{tpu_custom_call.1} parent=1 // pred_region
      %657 = dma.done [#allocation4], 128
    $region45: #{tpu_custom_call.1} parent=1 // pred_fallthru
      _
    %658 = vsyncpa [#allocation3], 1
    %659 = vsyncpa [#allocation4], 1

</llo_original>
